<compile_context>
chip_gen: v6e
topology: v6e:2x2x1
jax: 0.10.0
libtpu: 0.0.40
codegen_flags: <defaults>
</compile_context>

<pallas_src>
import jax
import jax.numpy as jnp
from jax.experimental import pallas as pl
from jax.experimental.pallas import tpu as pltpu


def _obe_kernel(b_ref, w_ref, x_ref, o_ref):
    # b_ref : (1,)          SMEM  -- conv bias
    # w_ref : (C*S*S, S*S)  VMEM  -- folded weight (kron(P,P) x conv weights)
    # x_ref : (TB, C*S*S)   VMEM  -- lane-dense batch tile
    # o_ref : (TB, S*S)     VMEM  -- flattened output tile
    out = jnp.dot(x_ref[...], w_ref[...], preferred_element_type=jnp.float32)
    o_ref[...] = (out + b_ref[0]).astype(o_ref.dtype)


def obe_block_forward(x, P, conv_w, conv_b, *, batch_tile=None):
    """x: (B, C, S, S) f32, P: (S, S), conv_w: (C,), conv_b: (1,).

    Returns (B, S*S) float32, matching OBEBlock.forward (already flattened).
    """
    B, C, S, _ = x.shape
    SS = S * S
    CSS = C * SS

    # --- Fold the whole linear op into one weight matrix (wrapper-side). ---
    # out_flat[b, r] = sum_{c,s} x_flat[b, c*SS + s] * w_c * KPP[r, s] + bias
    # where KPP = kron(P, P) gives KPP[i*S+l, j*S+k] = P[i,j] * P[l,k].
    P = jnp.asarray(P, jnp.float32)
    KPP = jnp.kron(P, P)                                        # (SS, SS)
    W_fold = (jnp.asarray(conv_w, jnp.float32)[:, None, None]
              * KPP.T[None, :, :]).reshape(CSS, SS)             # (CSS, SS)

    # Lane-dense input layout: (B, C*S*S) — contiguous reshape, free.
    x_flat = jnp.asarray(x, jnp.float32).reshape(B, CSS)

    # --- Batch tiling. ---
    if batch_tile is None:
        # Whole batch in one step for small B (block == full dim is layout
        # legal); otherwise 256 rows/step (multiple of 8, ~1 MiB moved/step).
        batch_tile = B if B <= 256 else 256
    num_tiles = -(-B // batch_tile)
    B_pad = num_tiles * batch_tile
    if B_pad != B:
        x_flat = jnp.pad(x_flat, ((0, B_pad - B), (0, 0)))

    out = pl.pallas_call(
        _obe_kernel,
        out_shape=jax.ShapeDtypeStruct((B_pad, SS), jnp.float32),
        grid=(num_tiles,),
        in_specs=[
            pl.BlockSpec(memory_space=pltpu.SMEM),                    # bias
            pl.BlockSpec((CSS, SS), lambda t: (0, 0)),                # W_fold
            pl.BlockSpec((batch_tile, CSS), lambda t: (t, 0)),        # x tile
        ],
        out_specs=pl.BlockSpec((batch_tile, SS), lambda t: (t, 0)),
        compiler_params=pltpu.CompilerParams(
            dimension_semantics=("parallel",)),
    )(jnp.asarray(conv_b, jnp.float32), W_fold, x_flat)

    if B_pad != B:
        out = out[:B]
    return out


def _make_params(img_size, key):
    """Deterministic parameter init mirroring OBEBlock.__init__ shapes."""
    k_p, k_w, k_b = jax.random.split(key, 3)
    # nn.init.orthogonal_(P): QR of a random normal matrix, sign-fixed.
    a = jax.random.normal(k_p, (img_size, img_size), dtype=jnp.float32)
    q, r = jnp.linalg.qr(a)
    q = q * jnp.sign(jnp.diag(r))[None, :]
    P = q.astype(jnp.float32)
    # nn.Conv2d(3, 1, 1, 1): weight (1,3,1,1) -> (3,), bias (1,).
    bound = 1.0 / jnp.sqrt(3.0)
    conv_w = jax.random.uniform(k_w, (3,), jnp.float32, -bound, bound)
    conv_b = jax.random.uniform(k_b, (1,), jnp.float32, -bound, bound)
    return P, conv_w, conv_b


if __name__ == "__main__":
    key = jax.random.PRNGKey(0)
    k_x, k_params = jax.random.split(key)

    B, C, S = 2, 3, 16                      # Conv2d(3, 1, ...) forces C = 3
    x = jax.random.normal(k_x, (B, C, S, S), dtype=jnp.float32)
    P, conv_w, conv_b = _make_params(S, k_params)

    out = obe_block_forward(x, P, conv_w, conv_b)
    out = jax.block_until_ready(out)

    # Reference check in plain JAX (same math as the PyTorch forward).
    y_ref = jnp.einsum("ij,bcjk,lk->bcil", P, x, P)           # P @ x @ P.T
    conv_ref = jnp.einsum("c,bchw->bhw", conv_w, y_ref) + conv_b[0]
    ref = conv_ref.reshape(B, -1)

    assert out.shape == (B, S * S)
    assert jnp.allclose(out, ref, atol=1e-4, rtol=1e-4)

    print("KERNEL_OK")
</pallas_src>

<mosaic_0001>
module attributes {stable_mosaic.version = 11 : i64} {
  func.func @_obe_kernel(%arg0: i32, %arg1: memref<1xf32, #tpu.memory_space<smem>>, %arg2: memref<768x256xf32, #tpu.memory_space<vmem>>, %arg3: memref<2x768xf32, #tpu.memory_space<vmem>>, %arg4: memref<2x256xf32, #tpu.memory_space<vmem>>) attributes {dimension_semantics = [#tpu.dimension_semantics<parallel>], iteration_bounds = array<i64: 1>, scalar_prefetch = 0 : i64, scratch_operands = 0 : i64, tpu.core_type = #tpu.core_type<tc>, window_params = [{transform_indices = @transform_0, window_bounds = array<i64: 1>}, {pipeline_mode = #tpu.pipeline_mode<synchronous>, transform_indices = @transform_1, window_bounds = array<i64: 768, 256>}, {transform_indices = @transform_2, window_bounds = array<i64: 2, 768>}, {transform_indices = @transform_3, window_bounds = array<i64: 2, 256>}]} {
    %c0 = arith.constant 0 : index
    %c0_0 = arith.constant 0 : index
    %0 = vector.load %arg3[%c0, %c0_0] : memref<2x768xf32, #tpu.memory_space<vmem>>, vector<2x768xf32>
    %c0_1 = arith.constant 0 : index
    %c0_2 = arith.constant 0 : index
    %1 = vector.load %arg2[%c0_1, %c0_2] : memref<768x256xf32, #tpu.memory_space<vmem>>, vector<768x256xf32>
    %cst = arith.constant dense<0.000000e+00> : vector<2x256xf32>
    %2 = tpu.matmul %0, %1, %cst {dimension_numbers = #tpu.dot_dimension_numbers<[1], [0], [0], [1], [0, 0, 1, 1], [], []>} : vector<2x768xf32>, vector<768x256xf32>, vector<2x256xf32> -> vector<2x256xf32>
    %c0_3 = arith.constant 0 : index
    %3 = memref.load %arg1[%c0_3] : memref<1xf32, #tpu.memory_space<smem>>
    %4 = vector.broadcast %3 : f32 to vector<2x256xf32>
    %5 = arith.addf %2, %4 : vector<2x256xf32>
    %c0_4 = arith.constant 0 : index
    %c0_5 = arith.constant 0 : index
    %6 = vector.load %arg4[%c0_4, %c0_5] : memref<2x256xf32, #tpu.memory_space<vmem>>, vector<2x256xf32>
    tpu.vector_store %arg4[%c0_4, %c0_5], %5 {strides = array<i32>} : memref<2x256xf32, #tpu.memory_space<vmem>>, vector<2x256xf32>,
    return
  }
  func.func @transform_0(%arg0: i32) -> i32 {
    %c0_i32 = arith.constant 0 : i32
    %c0_i32_0 = arith.constant 0 : i32
    return %c0_i32 : i32
  }
  func.func @transform_1(%arg0: i32) -> (i32, i32) {
    %c0_i32 = arith.constant 0 : i32
    %c0_i32_0 = arith.constant 0 : i32
    %c0_i32_1 = arith.constant 0 : i32
    return %c0_i32, %c0_i32_0 : i32, i32
  }
  func.func @transform_2(%arg0: i32) -> (i32, i32) {
    %c0_i32 = arith.constant 0 : i32
    %c0_i32_0 = arith.constant 0 : i32
    return %arg0, %c0_i32 : i32, i32
  }
  func.func @transform_3(%arg0: i32) -> (i32, i32) {
    %c0_i32 = arith.constant 0 : i32
    %c0_i32_0 = arith.constant 0 : i32
    return %arg0, %c0_i32 : i32, i32
  }
}

</mosaic_0001>

<llo_original>
// kernel: tpu_custom_call.1
$region0: #{tpu_custom_call.1}
  #allocation0 [shape = 'u32[]', space=smem, size = 0x4, offset = 0x4, fixed_abs, tag = 'smem constant byte address 0x4 - core index']
  #allocation1 [shape = 'u32[144,128]{1,0:T(1,128)}', space=vmem, size = 0x12000, scoped, tag = 'internal scratch']
  #allocation2 [shape = 'f32[1]{0:T(128)S(6)}', space=smem, size = 0x200, scoped, tag = 'scoped memory for tpu_custom_call.1']
  %s0 = inlined_call_operand.<no memory space> [shape: f32[1], index: 0, kind: input, shape index: {}]
  %s1 = inlined_call_operand.hbm [shape: f32[768,256], index: 1, kind: input, shape index: {}]
  %s2 = inlined_call_operand.hbm [shape: f32[2,768], index: 2, kind: input, shape index: {}]
  %s3 = inlined_call_operand.hbm [shape: f32[2,256], index: 3, kind: output, shape index: {}]
  %s4 = sld [smem:[#allocation0]]
  $region30: #{tpu_custom_call.1} parent=0
    _
  %s6 = ssub.s32 1, %s4
  %s7 = scalar_select 0, %s6, %s4
  %8 = sst [smem:[#allocation2]] %s0
  $region1: #{tpu_custom_call.1} parent=0
    #allocation3 [shape = 'u8[786432]{0}', space=vmem, size = 0xc0000, scoped, tag = 'input window, operand 1, single buffered']
    #allocation4 [shape = 's32[1]{0}', space=sflag, size = 0x4, scoped, tag = 'scoped memory for tpu_custom_call.1']
    #allocation5 [shape = 's32[1]{0}', space=sflag, size = 0x4, scoped, tag = 'scoped memory for tpu_custom_call.1']
    #allocation6 [shape = 'u8[6144]{0}', space=vmem, size = 0x1800, scoped, tag = 'input window, operand 2, single buffered']
    #allocation7 [shape = 's32[1]{0}', space=sflag, size = 0x4, scoped, tag = 'scoped memory for tpu_custom_call.1']
    #allocation8 [shape = 'u8[2048]{0}', space=vmem, size = 0x800, scoped, tag = 'output window, operand 0, single buffered']
    %9 = vsyncpa [#allocation4], 0
    %10 = vsyncpa [#allocation7], 0
    %11 = vsyncpa [#allocation5], 0
    // Predicated region
    $region2: #{tpu_custom_call.1} parent=1 // pred_check
      _
    $region3: #{tpu_custom_call.1} parent=1 // pred_check_branch
      %13 = sbr.rel (0) target = $region5
    $region4: #{tpu_custom_call.1} parent=1 // pred_region
      _
    $region5: #{tpu_custom_call.1} parent=1 // pred_fallthru
      _
    // Predicated region
    $region6: #{tpu_custom_call.1} parent=1 // pred_check
      _
    $region7: #{tpu_custom_call.1} parent=1 // pred_check_branch
      %15 = sbr.rel (0) target = $region9
    $region8: #{tpu_custom_call.1} parent=1 // pred_region
      %s17 = ssub.s32 24576, 24576
      %18 = vsyncadd [#allocation4], %s17
      %s19 = sshll.u32 [#allocation3], 4
      %s20 = int_to_ptr.vmem [resolvable:$true] %s19
      %25 = dma.hbm_to_vmem [thread:$0]  %s1, 24576, %s20, [#allocation4], 256, 256, 16
    $region9: #{tpu_custom_call.1} parent=1 // pred_fallthru
      _
    // Predicated region
    $region10: #{tpu_custom_call.1} parent=1 // pred_check
      _
    $region11: #{tpu_custom_call.1} parent=1 // pred_check_branch
      %27 = sbr.rel (0) target = $region13
    $region12: #{tpu_custom_call.1} parent=1 // pred_region
      %s29 = ssub.s32 192, 192
      %30 = vsyncadd [#allocation7], %s29
      %s32 = sshll.u32 [#allocation6], 4
      %s33 = int_to_ptr.vmem [resolvable:$true] %s32
      %35 = dma.hbm_to_vmem [thread:$0]  %s2, 192, %s33, [#allocation7]
    $region13: #{tpu_custom_call.1} parent=1 // pred_fallthru
      _
    // Predicated region
    $region14: #{tpu_custom_call.1} parent=1 // pred_check
      _
    $region15: #{tpu_custom_call.1} parent=1 // pred_check_branch
      %37 = sbr.rel (0) target = $region17
    $region16: #{tpu_custom_call.1} parent=1 // pred_region
      %38 = dma.done [#allocation4], 24576
    $region17: #{tpu_custom_call.1} parent=1 // pred_fallthru
      _
    // Predicated region
    $region18: #{tpu_custom_call.1} parent=1 // pred_check
      _
    $region19: #{tpu_custom_call.1} parent=1 // pred_check_branch
      %40 = sbr.rel (0) target = $region21
    $region20: #{tpu_custom_call.1} parent=1 // pred_region
      %41 = dma.done [#allocation7], 192
    $region21: #{tpu_custom_call.1} parent=1 // pred_fallthru
      _
    %v42 = vld [vmem:[#allocation6] sm:$0xff]
    %v43 = vld [vmem:[#allocation6 + $0x8] sm:$0xf]
    %v44 = vld [vmem:[#allocation3] sm:$0xff]
    %v45 = vld [vmem:[#allocation3 + $0x8] sm:$0xff]
    %v46 = vld [vmem:[#allocation3 + $0x10] sm:$0xff]
    %v47 = vld [vmem:[#allocation3 + $0x18] sm:$0xff]
    %v48 = vld [vmem:[#allocation3 + $0x20] sm:$0xff]
    %v49 = vld [vmem:[#allocation3 + $0x28] sm:$0xff]
    %v50 = vld [vmem:[#allocation3 + $0x30] sm:$0xff]
    %v51 = vld [vmem:[#allocation3 + $0x38] sm:$0xff]
    %v52 = vld [vmem:[#allocation3 + $0x40] sm:$0xff]
    %v53 = vld [vmem:[#allocation3 + $0x48] sm:$0xff]
    %v54 = vld [vmem:[#allocation3 + $0x50] sm:$0xff]
    %v55 = vld [vmem:[#allocation3 + $0x58] sm:$0xff]
    %v56 = vld [vmem:[#allocation3 + $0x60] sm:$0xff]
    %v57 = vld [vmem:[#allocation3 + $0x68] sm:$0xff]
    %v58 = vld [vmem:[#allocation3 + $0x70] sm:$0xff]
    %v59 = vld [vmem:[#allocation3 + $0x78] sm:$0xff]
    %v60 = vld [vmem:[#allocation3 + $0x80] sm:$0xff]
    %v61 = vld [vmem:[#allocation3 + $0x88] sm:$0xff]
    %v62 = vld [vmem:[#allocation3 + $0x90] sm:$0xff]
    %v63 = vld [vmem:[#allocation3 + $0x98] sm:$0xff]
    %v64 = vld [vmem:[#allocation3 + $0xa0] sm:$0xff]
    %v65 = vld [vmem:[#allocation3 + $0xa8] sm:$0xff]
    %v66 = vld [vmem:[#allocation3 + $0xb0] sm:$0xff]
    %v67 = vld [vmem:[#allocation3 + $0xb8] sm:$0xff]
    %v68 = vld [vmem:[#allocation3 + $0xc0] sm:$0xff]
    %v69 = vld [vmem:[#allocation3 + $0xc8] sm:$0xff]
    %v70 = vld [vmem:[#allocation3 + $0xd0] sm:$0xff]
    %v71 = vld [vmem:[#allocation3 + $0xd8] sm:$0xff]
    %v72 = vld [vmem:[#allocation3 + $0xe0] sm:$0xff]
    %v73 = vld [vmem:[#allocation3 + $0xe8] sm:$0xff]
    %v74 = vld [vmem:[#allocation3 + $0xf0] sm:$0xff]
    %v75 = vld [vmem:[#allocation3 + $0xf8] sm:$0xff]
    %v76 = vld [vmem:[#allocation3 + $0x100] sm:$0xff]
    %v77 = vld [vmem:[#allocation3 + $0x108] sm:$0xff]
    %v78 = vld [vmem:[#allocation3 + $0x110] sm:$0xff]
    %v79 = vld [vmem:[#allocation3 + $0x118] sm:$0xff]
    %v80 = vld [vmem:[#allocation3 + $0x120] sm:$0xff]
    %v81 = vld [vmem:[#allocation3 + $0x128] sm:$0xff]
    %v82 = vld [vmem:[#allocation3 + $0x130] sm:$0xff]
    %v83 = vld [vmem:[#allocation3 + $0x138] sm:$0xff]
    %v84 = vld [vmem:[#allocation3 + $0x140] sm:$0xff]
    %v85 = vld [vmem:[#allocation3 + $0x148] sm:$0xff]
    %v86 = vld [vmem:[#allocation3 + $0x150] sm:$0xff]
    %v87 = vld [vmem:[#allocation3 + $0x158] sm:$0xff]
    %v88 = vld [vmem:[#allocation3 + $0x160] sm:$0xff]
    %v89 = vld [vmem:[#allocation3 + $0x168] sm:$0xff]
    %v90 = vld [vmem:[#allocation3 + $0x170] sm:$0xff]
    %v91 = vld [vmem:[#allocation3 + $0x178] sm:$0xff]
    %v92 = vld [vmem:[#allocation3 + $0x180] sm:$0xff]
    %v93 = vld [vmem:[#allocation3 + $0x188] sm:$0xff]
    %v94 = vld [vmem:[#allocation3 + $0x190] sm:$0xff]
    %v95 = vld [vmem:[#allocation3 + $0x198] sm:$0xff]
    %v96 = vld [vmem:[#allocation3 + $0x1a0] sm:$0xff]
    %v97 = vld [vmem:[#allocation3 + $0x1a8] sm:$0xff]
    %v98 = vld [vmem:[#allocation3 + $0x1b0] sm:$0xff]
    %v99 = vld [vmem:[#allocation3 + $0x1b8] sm:$0xff]
    %v100 = vld [vmem:[#allocation3 + $0x1c0] sm:$0xff]
    %v101 = vld [vmem:[#allocation3 + $0x1c8] sm:$0xff]
    %v102 = vld [vmem:[#allocation3 + $0x1d0] sm:$0xff]
    %v103 = vld [vmem:[#allocation3 + $0x1d8] sm:$0xff]
    %v104 = vld [vmem:[#allocation3 + $0x1e0] sm:$0xff]
    %v105 = vld [vmem:[#allocation3 + $0x1e8] sm:$0xff]
    %v106 = vld [vmem:[#allocation3 + $0x1f0] sm:$0xff]
    %v107 = vld [vmem:[#allocation3 + $0x1f8] sm:$0xff]
    %v108 = vld [vmem:[#allocation3 + $0x200] sm:$0xff]
    %v109 = vld [vmem:[#allocation3 + $0x208] sm:$0xff]
    %v110 = vld [vmem:[#allocation3 + $0x210] sm:$0xff]
    %v111 = vld [vmem:[#allocation3 + $0x218] sm:$0xff]
    %v112 = vld [vmem:[#allocation3 + $0x220] sm:$0xff]
    %v113 = vld [vmem:[#allocation3 + $0x228] sm:$0xff]
    %v114 = vld [vmem:[#allocation3 + $0x230] sm:$0xff]
    %v115 = vld [vmem:[#allocation3 + $0x238] sm:$0xff]
    %v116 = vld [vmem:[#allocation3 + $0x240] sm:$0xff]
    %v117 = vld [vmem:[#allocation3 + $0x248] sm:$0xff]
    %v118 = vld [vmem:[#allocation3 + $0x250] sm:$0xff]
    %v119 = vld [vmem:[#allocation3 + $0x258] sm:$0xff]
    %v120 = vld [vmem:[#allocation3 + $0x260] sm:$0xff]
    %v121 = vld [vmem:[#allocation3 + $0x268] sm:$0xff]
    %v122 = vld [vmem:[#allocation3 + $0x270] sm:$0xff]
    %v123 = vld [vmem:[#allocation3 + $0x278] sm:$0xff]
    %v124 = vld [vmem:[#allocation3 + $0x280] sm:$0xff]
    %v125 = vld [vmem:[#allocation3 + $0x288] sm:$0xff]
    %v126 = vld [vmem:[#allocation3 + $0x290] sm:$0xff]
    %v127 = vld [vmem:[#allocation3 + $0x298] sm:$0xff]
    %v128 = vld [vmem:[#allocation3 + $0x2a0] sm:$0xff]
    %v129 = vld [vmem:[#allocation3 + $0x2a8] sm:$0xff]
    %v130 = vld [vmem:[#allocation3 + $0x2b0] sm:$0xff]
    %v131 = vld [vmem:[#allocation3 + $0x2b8] sm:$0xff]
    %v132 = vld [vmem:[#allocation3 + $0x2c0] sm:$0xff]
    %v133 = vld [vmem:[#allocation3 + $0x2c8] sm:$0xff]
    %v134 = vld [vmem:[#allocation3 + $0x2d0] sm:$0xff]
    %v135 = vld [vmem:[#allocation3 + $0x2d8] sm:$0xff]
    %v136 = vld [vmem:[#allocation3 + $0x2e0] sm:$0xff]
    %v137 = vld [vmem:[#allocation3 + $0x2e8] sm:$0xff]
    %v138 = vld [vmem:[#allocation3 + $0x2f0] sm:$0xff]
    %v139 = vld [vmem:[#allocation3 + $0x2f8] sm:$0xff]
    %v140 = vld [vmem:[#allocation3 + $0x300] sm:$0xff]
    %v141 = vld [vmem:[#allocation3 + $0x308] sm:$0xff]
    %v142 = vld [vmem:[#allocation3 + $0x310] sm:$0xff]
    %v143 = vld [vmem:[#allocation3 + $0x318] sm:$0xff]
    %v144 = vld [vmem:[#allocation3 + $0x320] sm:$0xff]
    %v145 = vld [vmem:[#allocation3 + $0x328] sm:$0xff]
    %v146 = vld [vmem:[#allocation3 + $0x330] sm:$0xff]
    %v147 = vld [vmem:[#allocation3 + $0x338] sm:$0xff]
    %v148 = vld [vmem:[#allocation3 + $0x340] sm:$0xff]
    %v149 = vld [vmem:[#allocation3 + $0x348] sm:$0xff]
    %v150 = vld [vmem:[#allocation3 + $0x350] sm:$0xff]
    %v151 = vld [vmem:[#allocation3 + $0x358] sm:$0xff]
    %v152 = vld [vmem:[#allocation3 + $0x360] sm:$0xff]
    %v153 = vld [vmem:[#allocation3 + $0x368] sm:$0xff]
    %v154 = vld [vmem:[#allocation3 + $0x370] sm:$0xff]
    %v155 = vld [vmem:[#allocation3 + $0x378] sm:$0xff]
    %v156 = vld [vmem:[#allocation3 + $0x380] sm:$0xff]
    %v157 = vld [vmem:[#allocation3 + $0x388] sm:$0xff]
    %v158 = vld [vmem:[#allocation3 + $0x390] sm:$0xff]
    %v159 = vld [vmem:[#allocation3 + $0x398] sm:$0xff]
    %v160 = vld [vmem:[#allocation3 + $0x3a0] sm:$0xff]
    %v161 = vld [vmem:[#allocation3 + $0x3a8] sm:$0xff]
    %v162 = vld [vmem:[#allocation3 + $0x3b0] sm:$0xff]
    %v163 = vld [vmem:[#allocation3 + $0x3b8] sm:$0xff]
    %v164 = vld [vmem:[#allocation3 + $0x3c0] sm:$0xff]
    %v165 = vld [vmem:[#allocation3 + $0x3c8] sm:$0xff]
    %v166 = vld [vmem:[#allocation3 + $0x3d0] sm:$0xff]
    %v167 = vld [vmem:[#allocation3 + $0x3d8] sm:$0xff]
    %v168 = vld [vmem:[#allocation3 + $0x3e0] sm:$0xff]
    %v169 = vld [vmem:[#allocation3 + $0x3e8] sm:$0xff]
    %v170 = vld [vmem:[#allocation3 + $0x3f0] sm:$0xff]
    %v171 = vld [vmem:[#allocation3 + $0x3f8] sm:$0xff]
    %v172 = vld [vmem:[#allocation3 + $0x400] sm:$0xff]
    %v173 = vld [vmem:[#allocation3 + $0x408] sm:$0xff]
    %v174 = vld [vmem:[#allocation3 + $0x410] sm:$0xff]
    %v175 = vld [vmem:[#allocation3 + $0x418] sm:$0xff]
    %v176 = vld [vmem:[#allocation3 + $0x420] sm:$0xff]
    %v177 = vld [vmem:[#allocation3 + $0x428] sm:$0xff]
    %v178 = vld [vmem:[#allocation3 + $0x430] sm:$0xff]
    %v179 = vld [vmem:[#allocation3 + $0x438] sm:$0xff]
    %v180 = vld [vmem:[#allocation3 + $0x440] sm:$0xff]
    %v181 = vld [vmem:[#allocation3 + $0x448] sm:$0xff]
    %v182 = vld [vmem:[#allocation3 + $0x450] sm:$0xff]
    %v183 = vld [vmem:[#allocation3 + $0x458] sm:$0xff]
    %v184 = vld [vmem:[#allocation3 + $0x460] sm:$0xff]
    %v185 = vld [vmem:[#allocation3 + $0x468] sm:$0xff]
    %v186 = vld [vmem:[#allocation3 + $0x470] sm:$0xff]
    %v187 = vld [vmem:[#allocation3 + $0x478] sm:$0xff]
    %v188 = vld [vmem:[#allocation3 + $0x480] sm:$0xff]
    %v189 = vld [vmem:[#allocation3 + $0x488] sm:$0xff]
    %v190 = vld [vmem:[#allocation3 + $0x490] sm:$0xff]
    %v191 = vld [vmem:[#allocation3 + $0x498] sm:$0xff]
    %v192 = vld [vmem:[#allocation3 + $0x4a0] sm:$0xff]
    %v193 = vld [vmem:[#allocation3 + $0x4a8] sm:$0xff]
    %v194 = vld [vmem:[#allocation3 + $0x4b0] sm:$0xff]
    %v195 = vld [vmem:[#allocation3 + $0x4b8] sm:$0xff]
    %v196 = vld [vmem:[#allocation3 + $0x4c0] sm:$0xff]
    %v197 = vld [vmem:[#allocation3 + $0x4c8] sm:$0xff]
    %v198 = vld [vmem:[#allocation3 + $0x4d0] sm:$0xff]
    %v199 = vld [vmem:[#allocation3 + $0x4d8] sm:$0xff]
    %v200 = vld [vmem:[#allocation3 + $0x4e0] sm:$0xff]
    %v201 = vld [vmem:[#allocation3 + $0x4e8] sm:$0xff]
    %v202 = vld [vmem:[#allocation3 + $0x4f0] sm:$0xff]
    %v203 = vld [vmem:[#allocation3 + $0x4f8] sm:$0xff]
    %v204 = vld [vmem:[#allocation3 + $0x500] sm:$0xff]
    %v205 = vld [vmem:[#allocation3 + $0x508] sm:$0xff]
    %v206 = vld [vmem:[#allocation3 + $0x510] sm:$0xff]
    %v207 = vld [vmem:[#allocation3 + $0x518] sm:$0xff]
    %v208 = vld [vmem:[#allocation3 + $0x520] sm:$0xff]
    %v209 = vld [vmem:[#allocation3 + $0x528] sm:$0xff]
    %v210 = vld [vmem:[#allocation3 + $0x530] sm:$0xff]
    %v211 = vld [vmem:[#allocation3 + $0x538] sm:$0xff]
    %v212 = vld [vmem:[#allocation3 + $0x540] sm:$0xff]
    %v213 = vld [vmem:[#allocation3 + $0x548] sm:$0xff]
    %v214 = vld [vmem:[#allocation3 + $0x550] sm:$0xff]
    %v215 = vld [vmem:[#allocation3 + $0x558] sm:$0xff]
    %v216 = vld [vmem:[#allocation3 + $0x560] sm:$0xff]
    %v217 = vld [vmem:[#allocation3 + $0x568] sm:$0xff]
    %v218 = vld [vmem:[#allocation3 + $0x570] sm:$0xff]
    %v219 = vld [vmem:[#allocation3 + $0x578] sm:$0xff]
    %v220 = vld [vmem:[#allocation3 + $0x580] sm:$0xff]
    %v221 = vld [vmem:[#allocation3 + $0x588] sm:$0xff]
    %v222 = vld [vmem:[#allocation3 + $0x590] sm:$0xff]
    %v223 = vld [vmem:[#allocation3 + $0x598] sm:$0xff]
    %v224 = vld [vmem:[#allocation3 + $0x5a0] sm:$0xff]
    %v225 = vld [vmem:[#allocation3 + $0x5a8] sm:$0xff]
    %v226 = vld [vmem:[#allocation3 + $0x5b0] sm:$0xff]
    %v227 = vld [vmem:[#allocation3 + $0x5b8] sm:$0xff]
    %v228 = vld [vmem:[#allocation3 + $0x5c0] sm:$0xff]
    %v229 = vld [vmem:[#allocation3 + $0x5c8] sm:$0xff]
    %v230 = vld [vmem:[#allocation3 + $0x5d0] sm:$0xff]
    %v231 = vld [vmem:[#allocation3 + $0x5d8] sm:$0xff]
    %v232 = vld [vmem:[#allocation3 + $0x5e0] sm:$0xff]
    %v233 = vld [vmem:[#allocation3 + $0x5e8] sm:$0xff]
    %v234 = vld [vmem:[#allocation3 + $0x5f0] sm:$0xff]
    %v235 = vld [vmem:[#allocation3 + $0x5f8] sm:$0xff]
    %s236 = sld [smem:[#allocation2]]
    %v237 = vstv %s236
    %v240 = vcombine.high %v42, %v42
    %v242 = vunpack.c.l.s4 1983009808
    %v243 = vunpack.c.0.s8 %v242
    %v244 = vlaneseq
    %v245 = vshrl.u32 %v244, 7
    %v246 = vsub.s32 %v243, %v245
    %v247 = vrot.slane %v42, %v246
    %v249 = vunpack.c.l.s4 1983009808
    %v250 = vunpack.c.0.s8 %v249
    %v251 = vlaneseq
    %v252 = vshrl.u32 %v251, 7
    %v253 = vsub.s32 %v250, %v252
    %v254 = vrot.slane %v240, %v253
    %v255 = vcombine.high %v247, %v247
    %v256 = vcombine.high %v254, %v254
    %v258 = vunpack.c.l.s4 1983009808
    %v259 = vunpack.c.0.s8 %v258
    %v260 = vlaneseq
    %v261 = vshrl.u32 %v260, 7
    %v262 = vsub.s32 %v259, %v261
    %v263 = vrot.slane %v43, %v262
    %v264 = vcombine.high %v263, %v263
    %271 = vmatprep.subr.mxu0 %v75
    %272 = vmatpush1.msra.mxu0 %v74
    %273 = vmatprep.subr.mxu0 %v73
    %274 = vmatpush1.msra.mxu0 %v72
    %275 = vmatprep.subr.mxu0 %v71
    %276 = vmatpush1.msra.mxu0 %v70
    %277 = vmatprep.subr.mxu0 %v69
    %278 = vmatpush1.msra.mxu0 %v68
    %279 = vmatprep.subr.mxu0 %v67
    %280 = vmatpush1.msra.mxu0 %v66
    %281 = vmatprep.subr.mxu0 %v65
    %282 = vmatpush1.msra.mxu0 %v64
    %283 = vmatprep.subr.mxu0 %v63
    %284 = vmatpush1.msra.mxu0 %v62
    %285 = vmatprep.subr.mxu0 %v61
    %286 = vmatpush1.msra.mxu0 %v60
    %287 = vmatprep.subr.mxu0 %v59
    %288 = vmatpush1.msra.mxu0 %v58
    %289 = vmatprep.subr.mxu0 %v57
    %290 = vmatpush1.msra.mxu0 %v56
    %291 = vmatprep.subr.mxu0 %v55
    %292 = vmatpush1.msra.mxu0 %v54
    %293 = vmatprep.subr.mxu0 %v53
    %294 = vmatpush1.msra.mxu0 %v52
    %295 = vmatprep.subr.mxu0 %v51
    %296 = vmatpush1.msra.mxu0 %v50
    %297 = vmatprep.subr.mxu0 %v49
    %298 = vmatpush1.msra.mxu0 %v48
    %299 = vmatprep.subr.mxu0 %v47
    %300 = vmatpush1.msra.mxu0 %v46
    %301 = vmatprep.subr.mxu0 %v45
    %302 = vmatpush1.msra.mxu0 %v44
    %303 = vmatprep.subr.mxu0 %v107
    %304 = vmatpush2.msra.mxu0 %v106
    %305 = vmatprep.subr.mxu0 %v105
    %306 = vmatpush2.msra.mxu0 %v104
    %307 = vmatprep.subr.mxu0 %v103
    %308 = vmatpush2.msra.mxu0 %v102
    %309 = vmatprep.subr.mxu0 %v101
    %310 = vmatpush2.msra.mxu0 %v100
    %311 = vmatprep.subr.mxu0 %v99
    %312 = vmatpush2.msra.mxu0 %v98
    %313 = vmatprep.subr.mxu0 %v97
    %314 = vmatpush2.msra.mxu0 %v96
    %315 = vmatprep.subr.mxu0 %v95
    %316 = vmatpush2.msra.mxu0 %v94
    %317 = vmatprep.subr.mxu0 %v93
    %318 = vmatpush2.msra.mxu0 %v92
    %319 = vmatprep.subr.mxu0 %v91
    %320 = vmatpush2.msra.mxu0 %v90
    %321 = vmatprep.subr.mxu0 %v89
    %322 = vmatpush2.msra.mxu0 %v88
    %323 = vmatprep.subr.mxu0 %v87
    %324 = vmatpush2.msra.mxu0 %v86
    %325 = vmatprep.subr.mxu0 %v85
    %326 = vmatpush2.msra.mxu0 %v84
    %327 = vmatprep.subr.mxu0 %v83
    %328 = vmatpush2.msra.mxu0 %v82
    %329 = vmatprep.subr.mxu0 %v81
    %330 = vmatpush2.msra.mxu0 %v80
    %331 = vmatprep.subr.mxu0 %v79
    %332 = vmatpush2.msra.mxu0 %v78
    %333 = vmatprep.subr.mxu0 %v77
    %334 = vmatpush2.msra.mxu0 %v76
    %335 = vmatprep.mubr.f32.mxu0 %v255
    %336 = vmatmul.mubr.f32.gmra.mxu0 %v247
    %v337 = vpop.f32.mrf.mxu0
    %v338 = vadd.f32 %v237, %v337
    %v339 = vpop.f32.mrf.mxu0
    %v340 = vadd.f32 %v237, %v339
    %341 = vdwg.mxu0
    %342 = vmatprep.subr.mxu0 %v139
    %343 = vmatpush1.msra.mxu0 %v138
    %344 = vmatprep.subr.mxu0 %v137
    %345 = vmatpush1.msra.mxu0 %v136
    %346 = vmatprep.subr.mxu0 %v135
    %347 = vmatpush1.msra.mxu0 %v134
    %348 = vmatprep.subr.mxu0 %v133
    %349 = vmatpush1.msra.mxu0 %v132
    %350 = vmatprep.subr.mxu0 %v131
    %351 = vmatpush1.msra.mxu0 %v130
    %352 = vmatprep.subr.mxu0 %v129
    %353 = vmatpush1.msra.mxu0 %v128
    %354 = vmatprep.subr.mxu0 %v127
    %355 = vmatpush1.msra.mxu0 %v126
    %356 = vmatprep.subr.mxu0 %v125
    %357 = vmatpush1.msra.mxu0 %v124
    %358 = vmatprep.subr.mxu0 %v123
    %359 = vmatpush1.msra.mxu0 %v122
    %360 = vmatprep.subr.mxu0 %v121
    %361 = vmatpush1.msra.mxu0 %v120
    %362 = vmatprep.subr.mxu0 %v119
    %363 = vmatpush1.msra.mxu0 %v118
    %364 = vmatprep.subr.mxu0 %v117
    %365 = vmatpush1.msra.mxu0 %v116
    %366 = vmatprep.subr.mxu0 %v115
    %367 = vmatpush1.msra.mxu0 %v114
    %368 = vmatprep.subr.mxu0 %v113
    %369 = vmatpush1.msra.mxu0 %v112
    %370 = vmatprep.subr.mxu0 %v111
    %371 = vmatpush1.msra.mxu0 %v110
    %372 = vmatprep.subr.mxu0 %v109
    %373 = vmatpush1.msra.mxu0 %v108
    %374 = vmatprep.subr.mxu0 %v171
    %375 = vmatpush2.msra.mxu0 %v170
    %376 = vmatprep.subr.mxu0 %v169
    %377 = vmatpush2.msra.mxu0 %v168
    %378 = vmatprep.subr.mxu0 %v167
    %379 = vmatpush2.msra.mxu0 %v166
    %380 = vmatprep.subr.mxu0 %v165
    %381 = vmatpush2.msra.mxu0 %v164
    %382 = vmatprep.subr.mxu0 %v163
    %383 = vmatpush2.msra.mxu0 %v162
    %384 = vmatprep.subr.mxu0 %v161
    %385 = vmatpush2.msra.mxu0 %v160
    %386 = vmatprep.subr.mxu0 %v159
    %387 = vmatpush2.msra.mxu0 %v158
    %388 = vmatprep.subr.mxu0 %v157
    %389 = vmatpush2.msra.mxu0 %v156
    %390 = vmatprep.subr.mxu0 %v155
    %391 = vmatpush2.msra.mxu0 %v154
    %392 = vmatprep.subr.mxu0 %v153
    %393 = vmatpush2.msra.mxu0 %v152
    %394 = vmatprep.subr.mxu0 %v151
    %395 = vmatpush2.msra.mxu0 %v150
    %396 = vmatprep.subr.mxu0 %v149
    %397 = vmatpush2.msra.mxu0 %v148
    %398 = vmatprep.subr.mxu0 %v147
    %399 = vmatpush2.msra.mxu0 %v146
    %400 = vmatprep.subr.mxu0 %v145
    %401 = vmatpush2.msra.mxu0 %v144
    %402 = vmatprep.subr.mxu0 %v143
    %403 = vmatpush2.msra.mxu0 %v142
    %404 = vmatprep.subr.mxu0 %v141
    %405 = vmatpush2.msra.mxu0 %v140
    %406 = vmatprep.mubr.f32.mxu0 %v256
    %407 = vmatmul.mubr.f32.gmra.mxu0 %v254
    %v408 = vpop.f32.mrf.mxu0
    %v409 = vadd.f32 %v338, %v408
    %v410 = vpop.f32.mrf.mxu0
    %v411 = vadd.f32 %v340, %v410
    %412 = vdwg.mxu0
    %413 = vmatprep.subr.mxu0 %v203
    %414 = vmatpush1.msra.mxu0 %v202
    %415 = vmatprep.subr.mxu0 %v201
    %416 = vmatpush1.msra.mxu0 %v200
    %417 = vmatprep.subr.mxu0 %v199
    %418 = vmatpush1.msra.mxu0 %v198
    %419 = vmatprep.subr.mxu0 %v197
    %420 = vmatpush1.msra.mxu0 %v196
    %421 = vmatprep.subr.mxu0 %v195
    %422 = vmatpush1.msra.mxu0 %v194
    %423 = vmatprep.subr.mxu0 %v193
    %424 = vmatpush1.msra.mxu0 %v192
    %425 = vmatprep.subr.mxu0 %v191
    %426 = vmatpush1.msra.mxu0 %v190
    %427 = vmatprep.subr.mxu0 %v189
    %428 = vmatpush1.msra.mxu0 %v188
    %429 = vmatprep.subr.mxu0 %v187
    %430 = vmatpush1.msra.mxu0 %v186
    %431 = vmatprep.subr.mxu0 %v185
    %432 = vmatpush1.msra.mxu0 %v184
    %433 = vmatprep.subr.mxu0 %v183
    %434 = vmatpush1.msra.mxu0 %v182
    %435 = vmatprep.subr.mxu0 %v181
    %436 = vmatpush1.msra.mxu0 %v180
    %437 = vmatprep.subr.mxu0 %v179
    %438 = vmatpush1.msra.mxu0 %v178
    %439 = vmatprep.subr.mxu0 %v177
    %440 = vmatpush1.msra.mxu0 %v176
    %441 = vmatprep.subr.mxu0 %v175
    %442 = vmatpush1.msra.mxu0 %v174
    %443 = vmatprep.subr.mxu0 %v173
    %444 = vmatpush1.msra.mxu0 %v172
    %445 = vmatprep.subr.mxu0 %v235
    %446 = vmatpush2.msra.mxu0 %v234
    %447 = vmatprep.subr.mxu0 %v233
    %448 = vmatpush2.msra.mxu0 %v232
    %449 = vmatprep.subr.mxu0 %v231
    %450 = vmatpush2.msra.mxu0 %v230
    %451 = vmatprep.subr.mxu0 %v229
    %452 = vmatpush2.msra.mxu0 %v228
    %453 = vmatprep.subr.mxu0 %v227
    %454 = vmatpush2.msra.mxu0 %v226
    %455 = vmatprep.subr.mxu0 %v225
    %456 = vmatpush2.msra.mxu0 %v224
    %457 = vmatprep.subr.mxu0 %v223
    %458 = vmatpush2.msra.mxu0 %v222
    %459 = vmatprep.subr.mxu0 %v221
    %460 = vmatpush2.msra.mxu0 %v220
    %461 = vmatprep.subr.mxu0 %v219
    %462 = vmatpush2.msra.mxu0 %v218
    %463 = vmatprep.subr.mxu0 %v217
    %464 = vmatpush2.msra.mxu0 %v216
    %465 = vmatprep.subr.mxu0 %v215
    %466 = vmatpush2.msra.mxu0 %v214
    %467 = vmatprep.subr.mxu0 %v213
    %468 = vmatpush2.msra.mxu0 %v212
    %469 = vmatprep.subr.mxu0 %v211
    %470 = vmatpush2.msra.mxu0 %v210
    %471 = vmatprep.subr.mxu0 %v209
    %472 = vmatpush2.msra.mxu0 %v208
    %473 = vmatprep.subr.mxu0 %v207
    %474 = vmatpush2.msra.mxu0 %v206
    %475 = vmatprep.subr.mxu0 %v205
    %476 = vmatpush2.msra.mxu0 %v204
    %477 = vmatprep.mubr.f32.mxu0 %v264
    %478 = vmatmul.mubr.f32.gmra.mxu0 %v263
    %v479 = vpop.f32.mrf.mxu0
    %v480 = vadd.f32 %v409, %v479
    %v481 = vpop.f32.mrf.mxu0
    %v482 = vadd.f32 %v411, %v481
    %483 = vdwg.mxu0
    %v486 = vcombine.low %v480, %v482
    %v488 = vunpack.c.l.s4 1983009808
    %v489 = vunpack.c.0.s8 %v488
    %v490 = vlaneseq
    %v491 = vshrl.u32 %v490, 7
    %v492 = vsub.s32 %v489, %v491
    %v493 = vrot.slane %v486, %v492
    %495 = vst [vmem:[#allocation8] sm:$0xf] %v493
    // Predicated region
    $region22: #{tpu_custom_call.1} parent=1 // pred_check
      _
    $region23: #{tpu_custom_call.1} parent=1 // pred_check_branch
      %497 = sbr.rel (0) target = $region25
    $region24: #{tpu_custom_call.1} parent=1 // pred_region
      %s499 = ssub.s32 64, 64
      %500 = vsyncadd [#allocation5], %s499
      %s502 = sshll.u32 [#allocation8], 4
      %s503 = int_to_ptr.vmem [resolvable:$true] %s502
      %505 = dma.vmem_to_hbm [thread:$0]  %s503, 64, %s3, [#allocation5]
    $region25: #{tpu_custom_call.1} parent=1 // pred_fallthru
      _
    // Predicated region
    $region26: #{tpu_custom_call.1} parent=1 // pred_check
      _
    $region27: #{tpu_custom_call.1} parent=1 // pred_check_branch
      %507 = sbr.rel (0) target = $region29
    $region28: #{tpu_custom_call.1} parent=1 // pred_region
      %508 = dma.done [#allocation5], 64
    $region29: #{tpu_custom_call.1} parent=1 // pred_fallthru
      _
    %509 = vsyncpa [#allocation4], 1
    %510 = vsyncpa [#allocation7], 1
    %511 = vsyncpa [#allocation5], 1

</llo_original>
